<compile_context>
chip_gen: v5e
topology: v5e:2x2
jax: 0.10.0
libtpu: 0.0.40
codegen_flags: <defaults>
</compile_context>

<pallas_src>
import functools

import jax
import jax.numpy as jnp
from jax import lax
from jax.experimental import pallas as pl
from jax.experimental.pallas import tpu as pltpu

# ----------------------------- module config --------------------------------
IN_CH = 4
OUT_CH = 8
KSIZE = 3
PADDING = 1
STRIDE = 1
BN_EPS = 1e-5
LRELU_SLOPE = 0.1


# ------------------------------- kernel -------------------------------------
def _cnn_block_kernel(a_ref, b_ref, gamma_ref, beta_ref, o_ref, *,
                      count, cout, num_groups, eps, slope):
    # a_ref     : [R, Kp]  bf16 row-band (im2col-lite) matrix, R = N*Ho
    # b_ref     : [Kp, L]  bf16 block-banded conv weight matrix, L = Wo*Cout
    # gamma_ref : [1, L]   f32 per-channel scale, tiled over Wo
    # beta_ref  : [1, L]   f32 per-channel shift, tiled over Wo
    # o_ref     : [R, L]   f32 lane-dense output

    # Convolution as a single MXU matmul (bf16 in, f32 accumulate), result is
    # already lane-dense [R, L].
    conv = jnp.dot(a_ref[...], b_ref[...], preferred_element_type=jnp.float32)

    # One-pass BatchNorm (training-mode) statistics.
    # Per-lane sublane reductions, stacked into one [2, L] tile, then a
    # log-stride cyclic roll chain sums over the Wo groups (stride = Cout) so
    # every lane ends up holding its channel's total.  XLU work only; no MXU
    # round trip, no spread-matrix DMA.
    stats = jnp.concatenate(
        [jnp.sum(conv, axis=0, keepdims=True),
         jnp.sum(conv * conv, axis=0, keepdims=True)],
        axis=0)                                               # [2, L]
    shift = cout
    for _ in range(num_groups.bit_length() - 1):              # log2(num_groups)
        stats = stats + pltpu.roll(stats, shift, 1)
        shift *= 2

    inv_count = 1.0 / count
    mean = stats[0:1, :] * inv_count                          # [1, L]
    ex2 = stats[1:2, :] * inv_count                           # [1, L]
    var = ex2 - mean * mean                                   # biased variance (BN)
    # TODO(synk): E[x^2]-mean^2 is cancellation-prone at large activation
    # magnitudes; switch to a centered formulation when scaling up.

    scale = gamma_ref[...] * lax.rsqrt(var + eps)             # rsqrt -> EUP slot
    offset = beta_ref[...] - mean * scale
    y = conv * scale + offset

    # LeakyReLU(0.1): one mul + max (valid for 0 < slope < 1).
    o_ref[...] = jnp.maximum(y, slope * y)


# -------------------- weight-only operand preparation ------------------------
def prepare_cnn_block_params(w_oihw, gamma, beta, *, in_h, in_w,
                             padding=PADDING, stride=STRIDE):
    """Build the weight-only kernel operands.

    Hoisted out of the per-step path: when the layer is applied repeatedly with
    the same weights / spatial size, call this once and reuse the results.
    """
    cout, cin, kh, kw = w_oihw.shape
    hp, wp = in_h + 2 * padding, in_w + 2 * padding
    ho = (hp - kh) // stride + 1
    wo = (wp - kw) // stride + 1
    k_dim = kh * wp * cin
    k_pad = ((k_dim + 127) // 128) * 128
    l_dim = wo * cout

    # B: block-banded weight matrix [KH*Wp*Cin, Wo*Cout]:
    #   B[(r, p, ci), (o, co)] = w[r, p - o*stride, ci, co] if in-band else 0
    # TODO(synk): at real widths abandon this Toeplitz expansion for standard
    # im2col ([rows, kh*kw*Cin] @ [kh*kw*Cin, Cout]); it is O(W^2*Cin*Cout) and
    # mostly structural zeros.
    w_hwio = jnp.transpose(w_oihw, (2, 3, 1, 0)).astype(jnp.float32)  # [KH,KW,Cin,Cout]
    onehot = (jnp.arange(wp)[:, None, None]
              == (jnp.arange(wo)[None, :, None] * stride
                  + jnp.arange(kw)[None, None, :])).astype(jnp.float32)  # [Wp,Wo,KW]
    b = jnp.einsum('pok,hkic->hpioc', onehot, w_hwio).reshape(k_dim, l_dim)
    b = jnp.pad(b, ((0, k_pad - k_dim), (0, 0))).astype(jnp.bfloat16)    # [Kp, L]

    gamma_t = jnp.tile(gamma.astype(jnp.float32), wo).reshape(1, l_dim)
    beta_t = jnp.tile(beta.astype(jnp.float32), wo).reshape(1, l_dim)

    meta = dict(cin=cin, cout=cout, kh=kh, kw=kw, padding=padding, stride=stride,
                ho=ho, wo=wo, wp=wp, k_pad=k_pad, l_dim=l_dim)
    return b, gamma_t, beta_t, meta


# ------------------------------- wrapper -------------------------------------
def cnn_block_forward(x_nchw, b_op, gamma_t, beta_t, meta, *,
                      eps=BN_EPS, slope=LRELU_SLOPE):
    """Forward pass of CNNBlock. Input/output are NCHW (PyTorch convention)."""
    n, cin, h, w_in = x_nchw.shape
    kh, stride, padding = meta['kh'], meta['stride'], meta['padding']
    ho, wo, wp = meta['ho'], meta['wo'], meta['wp']
    k_pad, l_dim, cout = meta['k_pad'], meta['l_dim'], meta['cout']

    # NCHW -> NHWC, replicate padding (padding_mode='replicate').
    x_nhwc = jnp.transpose(x_nchw, (0, 2, 3, 1)).astype(jnp.float32)
    x_pad = jnp.pad(x_nhwc,
                    ((0, 0), (padding, padding), (padding, padding), (0, 0)),
                    mode="edge")

    # A: stack the KH input row-bands -> [N*Ho, KH*Wp*Cin], lane-align K, bf16.
    # TODO(synk): fuse this band extraction into the kernel (row-offset in_specs
    # or manual DMA from the padded NHWC input) to avoid an extra activation
    # HBM round trip at real sizes.
    bands = [
        x_pad[:, r:r + (ho - 1) * stride + 1:stride, :, :].reshape(n * ho, wp * cin)
        for r in range(kh)
    ]
    a = jnp.concatenate(bands, axis=1)                        # [N*Ho, KH*Wp*Cin]
    k_dim = kh * wp * cin
    a = jnp.pad(a, ((0, 0), (0, k_pad - k_dim))).astype(jnp.bfloat16)  # [N*Ho, Kp]

    rows = n * ho
    num_groups = wo
    assert num_groups & (num_groups - 1) == 0, \
        "log-stride roll reduce assumes power-of-2 Wo"

    kernel = functools.partial(_cnn_block_kernel,
                               count=n * ho * wo, cout=cout,
                               num_groups=num_groups, eps=eps, slope=slope)

    out2d = pl.pallas_call(
        kernel,
        out_shape=jax.ShapeDtypeStruct((rows, l_dim), jnp.float32),
        grid=(1,),
        in_specs=[
            pl.BlockSpec((rows, k_pad), lambda i: (0, 0)),
            pl.BlockSpec((k_pad, l_dim), lambda i: (0, 0)),
            pl.BlockSpec((1, l_dim), lambda i: (0, 0)),
            pl.BlockSpec((1, l_dim), lambda i: (0, 0)),
        ],
        out_specs=pl.BlockSpec((rows, l_dim), lambda i: (0, 0)),
        compiler_params=pltpu.CompilerParams(
            dimension_semantics=("arbitrary",)),
    )(a, b_op, gamma_t, beta_t)
    # TODO(synk): at real sizes tile N*Ho rows as a "parallel" grid axis (with a
    # two-stage conv -> global-BN reduction), use >=256-wide lane tiles for the
    # v6e/v7x MXU, and budget VMEM for v7x's 64 MiB.

    # [N*Ho, Wo*Cout] -> [N, Ho, Wo, Cout] (pure reshape) -> NCHW.
    out_nhwc = out2d.reshape(n, ho, wo, cout)
    return jnp.transpose(out_nhwc, (0, 3, 1, 2))


# --------------------------- pure-JAX reference ------------------------------
def reference_forward(x_nchw, w_oihw, gamma, beta, *,
                      padding=PADDING, stride=STRIDE,
                      eps=BN_EPS, slope=LRELU_SLOPE):
    xp = jnp.pad(x_nchw, ((0, 0), (0, 0), (padding, padding), (padding, padding)),
                 mode="edge")
    y = lax.conv_general_dilated(xp, w_oihw, (stride, stride), "VALID",
                                 dimension_numbers=("NCHW", "OIHW", "NCHW"))
    mean = jnp.mean(y, axis=(0, 2, 3), keepdims=True)
    var = jnp.mean((y - mean) ** 2, axis=(0, 2, 3), keepdims=True)  # biased (BN)
    y = (y - mean) * lax.rsqrt(var + eps)
    y = y * gamma.reshape(1, -1, 1, 1) + beta.reshape(1, -1, 1, 1)
    return jnp.where(y > 0, y, slope * y)


# --------------------------------- main --------------------------------------
if __name__ == "__main__":
    key = jax.random.PRNGKey(0)
    k_x, k_w, k_g, k_b = jax.random.split(key, 4)

    # Small shapes consistent with the module: batch=2, C_in=4, 16x16 spatial.
    x = jax.random.normal(k_x, (2, IN_CH, 16, 16), dtype=jnp.float32)

    # Deterministic synthetic parameters (shapes from the module's __init__).
    w = jax.random.normal(k_w, (OUT_CH, IN_CH, KSIZE, KSIZE), dtype=jnp.float32) * 0.1
    gamma = 1.0 + 0.1 * jax.random.normal(k_g, (OUT_CH,), dtype=jnp.float32)
    beta = 0.1 * jax.random.normal(k_b, (OUT_CH,), dtype=jnp.float32)

    # Weight-only operands built once (hoisted out of the per-step path).
    b_op, gamma_t, beta_t, meta = prepare_cnn_block_params(
        w, gamma, beta, in_h=16, in_w=16)

    out = cnn_block_forward(x, b_op, gamma_t, beta_t, meta)
    out = jax.block_until_ready(out)

    ref = jax.block_until_ready(reference_forward(x, w, gamma, beta))
    assert out.shape == ref.shape == (2, OUT_CH, 16, 16)
    # bf16 MXU operands -> looser tolerance than the pure-f32 reference.
    err = jnp.max(jnp.abs(out - ref))
    assert jnp.allclose(out, ref, rtol=5e-2, atol=5e-2), f"max abs err = {err}"

    print("KERNEL_OK")
</pallas_src>

<mosaic_0001>
module attributes {stable_mosaic.version = 11 : i64} {
  func.func @_cnn_block_kernel(%arg0: i32, %arg1: memref<32x256xbf16, #tpu.memory_space<vmem>>, %arg2: memref<256x128xbf16, #tpu.memory_space<vmem>>, %arg3: memref<1x128xf32, #tpu.memory_space<vmem>>, %arg4: memref<1x128xf32, #tpu.memory_space<vmem>>, %arg5: memref<32x128xf32, #tpu.memory_space<vmem>>) attributes {dimension_semantics = [#tpu.dimension_semantics<arbitrary>], iteration_bounds = array<i64: 1>, scalar_prefetch = 0 : i64, scratch_operands = 0 : i64, tpu.core_type = #tpu.core_type<tc>, window_params = [{pipeline_mode = #tpu.pipeline_mode<synchronous>, transform_indices = @transform_0, window_bounds = array<i64: 32, 256>}, {pipeline_mode = #tpu.pipeline_mode<synchronous>, transform_indices = @transform_1, window_bounds = array<i64: 256, 128>}, {pipeline_mode = #tpu.pipeline_mode<synchronous>, transform_indices = @transform_2, window_bounds = array<i64: 1, 128>}, {pipeline_mode = #tpu.pipeline_mode<synchronous>, transform_indices = @transform_3, window_bounds = array<i64: 1, 128>}, {pipeline_mode = #tpu.pipeline_mode<synchronous>, transform_indices = @transform_4, window_bounds = array<i64: 32, 128>}]} {
    %c0 = arith.constant 0 : index
    %c0_0 = arith.constant 0 : index
    %0 = vector.load %arg1[%c0, %c0_0] : memref<32x256xbf16, #tpu.memory_space<vmem>>, vector<32x256xbf16>
    %c0_1 = arith.constant 0 : index
    %c0_2 = arith.constant 0 : index
    %1 = vector.load %arg2[%c0_1, %c0_2] : memref<256x128xbf16, #tpu.memory_space<vmem>>, vector<256x128xbf16>
    %cst = arith.constant dense<0.000000e+00> : vector<32x128xf32>
    %2 = tpu.matmul %0, %1, %cst {dimension_numbers = #tpu.dot_dimension_numbers<[1], [0], [0], [1], [0, 0, 1, 1], [], []>} : vector<32x256xbf16>, vector<256x128xbf16>, vector<32x128xf32> -> vector<32x128xf32>
    %cst_3 = arith.constant dense<0.000000e+00> : vector<128xf32>
    %3 = vector.multi_reduction <add>, %2, %cst_3 [0] : vector<32x128xf32> to vector<128xf32>
    %4 = vector.shape_cast %3 : vector<128xf32> to vector<1x128xf32>
    %5 = arith.mulf %2, %2 : vector<32x128xf32>
    %cst_4 = arith.constant dense<0.000000e+00> : vector<128xf32>
    %6 = vector.multi_reduction <add>, %5, %cst_4 [0] : vector<32x128xf32> to vector<128xf32>
    %7 = vector.shape_cast %6 : vector<128xf32> to vector<1x128xf32>
    %8 = tpu.concatenate %4, %7 in 0 : vector<1x128xf32>, vector<1x128xf32> -> vector<2x128xf32>
    %c8_i32 = arith.constant 8 : i32
    %9 = tpu.dynamic_rotate %8 by %c8_i32 dim 1 : vector<2x128xf32>, i32 -> vector<2x128xf32>
    %10 = arith.addf %8, %9 : vector<2x128xf32>
    %c16_i32 = arith.constant 16 : i32
    %11 = tpu.dynamic_rotate %10 by %c16_i32 dim 1 : vector<2x128xf32>, i32 -> vector<2x128xf32>
    %12 = arith.addf %10, %11 : vector<2x128xf32>
    %c32_i32 = arith.constant 32 : i32
    %13 = tpu.dynamic_rotate %12 by %c32_i32 dim 1 : vector<2x128xf32>, i32 -> vector<2x128xf32>
    %14 = arith.addf %12, %13 : vector<2x128xf32>
    %c64_i32 = arith.constant 64 : i32
    %15 = tpu.dynamic_rotate %14 by %c64_i32 dim 1 : vector<2x128xf32>, i32 -> vector<2x128xf32>
    %16 = arith.addf %14, %15 : vector<2x128xf32>
    %17 = vector.extract_strided_slice %16 {offsets = [0, 0], sizes = [1, 128], strides = [1, 1]} : vector<2x128xf32> to vector<1x128xf32>
    %cst_5 = arith.constant 0.001953125 : f32
    %18 = vector.broadcast %cst_5 : f32 to vector<1x128xf32>
    %19 = arith.mulf %17, %18 : vector<1x128xf32>
    %20 = vector.extract_strided_slice %16 {offsets = [1, 0], sizes = [1, 128], strides = [1, 1]} : vector<2x128xf32> to vector<1x128xf32>
    %cst_6 = arith.constant 0.001953125 : f32
    %21 = vector.broadcast %cst_6 : f32 to vector<1x128xf32>
    %22 = arith.mulf %20, %21 : vector<1x128xf32>
    %23 = arith.mulf %19, %19 : vector<1x128xf32>
    %24 = arith.subf %22, %23 : vector<1x128xf32>
    %c0_7 = arith.constant 0 : index
    %c0_8 = arith.constant 0 : index
    %25 = vector.load %arg3[%c0_7, %c0_8] : memref<1x128xf32, #tpu.memory_space<vmem>>, vector<1x128xf32>
    %cst_9 = arith.constant 9.99999974E-6 : f32
    %26 = vector.broadcast %cst_9 : f32 to vector<1x128xf32>
    %27 = arith.addf %24, %26 : vector<1x128xf32>
    %28 = math.rsqrt %27 : vector<1x128xf32>
    %29 = arith.mulf %25, %28 : vector<1x128xf32>
    %c0_10 = arith.constant 0 : index
    %c0_11 = arith.constant 0 : index
    %30 = vector.load %arg4[%c0_10, %c0_11] : memref<1x128xf32, #tpu.memory_space<vmem>>, vector<1x128xf32>
    %31 = arith.mulf %19, %29 : vector<1x128xf32>
    %32 = arith.subf %30, %31 : vector<1x128xf32>
    %33 = vector.broadcast %29 : vector<1x128xf32> to vector<32x128xf32>
    %34 = arith.mulf %2, %33 : vector<32x128xf32>
    %35 = vector.broadcast %32 : vector<1x128xf32> to vector<32x128xf32>
    %36 = arith.addf %34, %35 : vector<32x128xf32>
    %cst_12 = arith.constant 1.000000e-01 : f32
    %37 = vector.broadcast %cst_12 : f32 to vector<32x128xf32>
    %38 = arith.mulf %37, %36 : vector<32x128xf32>
    %39 = arith.maximumf %36, %38 : vector<32x128xf32>
    %c0_13 = arith.constant 0 : index
    %c0_14 = arith.constant 0 : index
    %40 = vector.load %arg5[%c0_13, %c0_14] : memref<32x128xf32, #tpu.memory_space<vmem>>, vector<32x128xf32>
    tpu.vector_store %arg5[%c0_13, %c0_14], %39 {strides = array<i32>} : memref<32x128xf32, #tpu.memory_space<vmem>>, vector<32x128xf32>,
    return
  }
  func.func @transform_0(%arg0: i32) -> (i32, i32) {
    %c0_i32 = arith.constant 0 : i32
    %c0_i32_0 = arith.constant 0 : i32
    %c0_i32_1 = arith.constant 0 : i32
    return %c0_i32, %c0_i32_0 : i32, i32
  }
  func.func @transform_1(%arg0: i32) -> (i32, i32) {
    %c0_i32 = arith.constant 0 : i32
    %c0_i32_0 = arith.constant 0 : i32
    %c0_i32_1 = arith.constant 0 : i32
    return %c0_i32, %c0_i32_0 : i32, i32
  }
  func.func @transform_2(%arg0: i32) -> (i32, i32) {
    %c0_i32 = arith.constant 0 : i32
    %c0_i32_0 = arith.constant 0 : i32
    %c0_i32_1 = arith.constant 0 : i32
    return %c0_i32, %c0_i32_0 : i32, i32
  }
  func.func @transform_3(%arg0: i32) -> (i32, i32) {
    %c0_i32 = arith.constant 0 : i32
    %c0_i32_0 = arith.constant 0 : i32
    %c0_i32_1 = arith.constant 0 : i32
    return %c0_i32, %c0_i32_0 : i32, i32
  }
  func.func @transform_4(%arg0: i32) -> (i32, i32) {
    %c0_i32 = arith.constant 0 : i32
    %c0_i32_0 = arith.constant 0 : i32
    %c0_i32_1 = arith.constant 0 : i32
    return %c0_i32, %c0_i32_0 : i32, i32
  }
}

</mosaic_0001>

<llo_original>
// kernel: tpu_custom_call.1
$region0: #{tpu_custom_call.1}
  #allocation0 [shape = 'u32[]', space=smem, size = 0x4, offset = 0x4, fixed_abs, tag = 'smem constant byte address 0x4 - core index']
  #allocation1 [shape = 'u32[72,128]{1,0:T(1,128)}', space=vmem, size = 0x9000, scoped, tag = 'internal scratch']
  %s0 = inlined_call_operand.hbm [shape: bf16[32,256], index: 0, kind: input, shape index: {}]
  %s1 = inlined_call_operand.hbm [shape: bf16[256,128], index: 1, kind: input, shape index: {}]
  %s2 = inlined_call_operand.vmem [shape: f32[1,128], index: 2, kind: input, shape index: {}]
  %s3 = inlined_call_operand.vmem [shape: f32[1,128], index: 3, kind: input, shape index: {}]
  %s4 = inlined_call_operand.hbm [shape: f32[32,128], index: 4, kind: output, shape index: {}]
  %s5 = sld [smem:[#allocation0]]
  $region34: #{tpu_custom_call.1} parent=0
    _
  %s7 = ssub.s32 1, %s5
  %s8 = scalar_select 0, %s7, %s5
  $region1: #{tpu_custom_call.1} parent=0
    #allocation2 [shape = 'u8[16384]{0}', space=vmem, size = 0x4000, scoped, tag = 'input window, operand 0, single buffered']
    #allocation3 [shape = 's32[1]{0}', space=sflag, size = 0x4, scoped, tag = 'scoped memory for tpu_custom_call.1']
    #allocation4 [shape = 's32[1]{0}', space=sflag, size = 0x4, scoped, tag = 'scoped memory for tpu_custom_call.1']
    #allocation5 [shape = 'u8[65536]{0}', space=vmem, size = 0x10000, scoped, tag = 'input window, operand 1, single buffered']
    #allocation6 [shape = 's32[1]{0}', space=sflag, size = 0x4, scoped, tag = 'scoped memory for tpu_custom_call.1']
    #allocation7 [shape = 'u8[16384]{0}', space=vmem, size = 0x4000, scoped, tag = 'output window, operand 0, single buffered']
    %9 = vsyncpa [#allocation3], 0
    %10 = vsyncpa [#allocation6], 0
    %11 = vsyncpa [#allocation4], 0
    // Predicated region
    $region2: #{tpu_custom_call.1} parent=1 // pred_check
      _
    $region3: #{tpu_custom_call.1} parent=1 // pred_check_branch
      %13 = sbr.rel (0) target = $region5
    $region4: #{tpu_custom_call.1} parent=1 // pred_region
      %15 = vsyncadd [#allocation3], 0
      %s16 = sshll.u32 %s0, 4
      %s17 = int_to_ptr.hbm [resolvable:$true] %s16
      %s18 = sshll.u32 [#allocation2], 4
      %s19 = int_to_ptr.vmem [resolvable:$true] %s18
      %24 = dma.hbm_to_vmem [thread:$0]  %s17, 512, %s19, [#allocation3], 128, 128, 8
    $region5: #{tpu_custom_call.1} parent=1 // pred_fallthru
      _
    // Predicated region
    $region6: #{tpu_custom_call.1} parent=1 // pred_check
      _
    $region7: #{tpu_custom_call.1} parent=1 // pred_check_branch
      %26 = sbr.rel (0) target = $region9
    $region8: #{tpu_custom_call.1} parent=1 // pred_region
      %28 = vsyncadd [#allocation6], 0
      %s29 = sshll.u32 %s1, 4
      %s30 = int_to_ptr.hbm [resolvable:$true] %s29
      %s31 = sshll.u32 [#allocation5], 4
      %s32 = int_to_ptr.vmem [resolvable:$true] %s31
      %37 = dma.hbm_to_vmem [thread:$0]  %s30, 2048, %s32, [#allocation6], 64, 64, 4
    $region9: #{tpu_custom_call.1} parent=1 // pred_fallthru
      _
    // Predicated region
    $region10: #{tpu_custom_call.1} parent=1 // pred_check
      _
    $region11: #{tpu_custom_call.1} parent=1 // pred_check_branch
      %39 = sbr.rel (0) target = $region13
    $region12: #{tpu_custom_call.1} parent=1 // pred_region
      _
    $region13: #{tpu_custom_call.1} parent=1 // pred_fallthru
      _
    // Predicated region
    $region14: #{tpu_custom_call.1} parent=1 // pred_check
      _
    $region15: #{tpu_custom_call.1} parent=1 // pred_check_branch
      %41 = sbr.rel (0) target = $region17
    $region16: #{tpu_custom_call.1} parent=1 // pred_region
      _
    $region17: #{tpu_custom_call.1} parent=1 // pred_fallthru
      _
    // Predicated region
    $region18: #{tpu_custom_call.1} parent=1 // pred_check
      _
    $region19: #{tpu_custom_call.1} parent=1 // pred_check_branch
      %43 = sbr.rel (0) target = $region21
    $region20: #{tpu_custom_call.1} parent=1 // pred_region
      %45 = dma.done [#allocation3], 512
    $region21: #{tpu_custom_call.1} parent=1 // pred_fallthru
      _
    // Predicated region
    $region22: #{tpu_custom_call.1} parent=1 // pred_check
      _
    $region23: #{tpu_custom_call.1} parent=1 // pred_check_branch
      %47 = sbr.rel (0) target = $region25
    $region24: #{tpu_custom_call.1} parent=1 // pred_region
      %49 = dma.done [#allocation6], 2048
    $region25: #{tpu_custom_call.1} parent=1 // pred_fallthru
      _
    %v50 = vld [vmem:[#allocation2] sm:$0xff]
    %v51 = vld [vmem:[#allocation2 + $0x8] sm:$0xff]
    %v52 = vld [vmem:[#allocation2 + $0x10] sm:$0xff]
    %v53 = vld [vmem:[#allocation2 + $0x18] sm:$0xff]
    %v54 = vld [vmem:[#allocation5] sm:$0xf]
    %v55 = vld [vmem:[#allocation5 + $0x4] sm:$0xf]
    %v56 = vld [vmem:[#allocation5 + $0x8] sm:$0xf]
    %v57 = vld [vmem:[#allocation5 + $0xc] sm:$0xf]
    %v58 = vld [vmem:[#allocation5 + $0x10] sm:$0xf]
    %v59 = vld [vmem:[#allocation5 + $0x14] sm:$0xf]
    %v60 = vld [vmem:[#allocation5 + $0x18] sm:$0xf]
    %v61 = vld [vmem:[#allocation5 + $0x1c] sm:$0xf]
    %v62 = vld [vmem:[#allocation5 + $0x20] sm:$0xf]
    %v63 = vld [vmem:[#allocation5 + $0x24] sm:$0xf]
    %v64 = vld [vmem:[#allocation5 + $0x28] sm:$0xf]
    %v65 = vld [vmem:[#allocation5 + $0x2c] sm:$0xf]
    %v66 = vld [vmem:[#allocation5 + $0x30] sm:$0xf]
    %v67 = vld [vmem:[#allocation5 + $0x34] sm:$0xf]
    %v68 = vld [vmem:[#allocation5 + $0x38] sm:$0xf]
    %v69 = vld [vmem:[#allocation5 + $0x3c] sm:$0xf]
    %v70 = vld [vmem:[#allocation5 + $0x40] sm:$0xf]
    %v71 = vld [vmem:[#allocation5 + $0x44] sm:$0xf]
    %v72 = vld [vmem:[#allocation5 + $0x48] sm:$0xf]
    %v73 = vld [vmem:[#allocation5 + $0x4c] sm:$0xf]
    %v74 = vld [vmem:[#allocation5 + $0x50] sm:$0xf]
    %v75 = vld [vmem:[#allocation5 + $0x54] sm:$0xf]
    %v76 = vld [vmem:[#allocation5 + $0x58] sm:$0xf]
    %v77 = vld [vmem:[#allocation5 + $0x5c] sm:$0xf]
    %v78 = vld [vmem:[#allocation5 + $0x60] sm:$0xf]
    %v79 = vld [vmem:[#allocation5 + $0x64] sm:$0xf]
    %v80 = vld [vmem:[#allocation5 + $0x68] sm:$0xf]
    %v81 = vld [vmem:[#allocation5 + $0x6c] sm:$0xf]
    %v82 = vld [vmem:[#allocation5 + $0x70] sm:$0xf]
    %v83 = vld [vmem:[#allocation5 + $0x74] sm:$0xf]
    %v84 = vld [vmem:[#allocation5 + $0x78] sm:$0xf]
    %v85 = vld [vmem:[#allocation5 + $0x7c] sm:$0xf]
    %v90 = vunpack.c.l.b16 %v50
    %v91 = vunpack.c.h.b16 %v50
    %v92 = vunpack.c.l.b16 %v51
    %v93 = vunpack.c.h.b16 %v51
    %v94 = vunpack.c.l.b16 %v52
    %v95 = vunpack.c.h.b16 %v52
    %v96 = vunpack.c.l.b16 %v53
    %v97 = vunpack.c.h.b16 %v53
    %v98 = vpack.c.b16 %v92, %v90
    %v99 = vpack.c.b16 %v93, %v91
    %v100 = vpack.c.b16 %v96, %v94
    %v101 = vpack.c.b16 %v97, %v95
    %v138 = vunpack.c.l.b16 %v54
    %v139 = vunpack.c.l.b16 %v55
    %v140 = vunpack.c.l.b16 %v56
    %v141 = vunpack.c.l.b16 %v57
    %v142 = vunpack.c.l.b16 %v58
    %v143 = vunpack.c.l.b16 %v59
    %v144 = vunpack.c.l.b16 %v60
    %v145 = vunpack.c.l.b16 %v61
    %v146 = vunpack.c.l.b16 %v62
    %v147 = vunpack.c.l.b16 %v63
    %v148 = vunpack.c.l.b16 %v64
    %v149 = vunpack.c.l.b16 %v65
    %v150 = vunpack.c.l.b16 %v66
    %v151 = vunpack.c.l.b16 %v67
    %v152 = vunpack.c.l.b16 %v68
    %v153 = vunpack.c.l.b16 %v69
    %v154 = vunpack.c.l.b16 %v70
    %v155 = vunpack.c.l.b16 %v71
    %v156 = vunpack.c.l.b16 %v72
    %v157 = vunpack.c.l.b16 %v73
    %v158 = vunpack.c.l.b16 %v74
    %v159 = vunpack.c.l.b16 %v75
    %v160 = vunpack.c.l.b16 %v76
    %v161 = vunpack.c.l.b16 %v77
    %v162 = vunpack.c.l.b16 %v78
    %v163 = vunpack.c.l.b16 %v79
    %v164 = vunpack.c.l.b16 %v80
    %v165 = vunpack.c.l.b16 %v81
    %v166 = vunpack.c.l.b16 %v82
    %v167 = vunpack.c.l.b16 %v83
    %v168 = vunpack.c.l.b16 %v84
    %v169 = vunpack.c.l.b16 %v85
    %v170 = vpack.c.b16 %v139, %v138
    %v171 = vpack.c.b16 %v141, %v140
    %v172 = vpack.c.b16 %v143, %v142
    %v173 = vpack.c.b16 %v145, %v144
    %v174 = vpack.c.b16 %v147, %v146
    %v175 = vpack.c.b16 %v149, %v148
    %v176 = vpack.c.b16 %v151, %v150
    %v177 = vpack.c.b16 %v153, %v152
    %v178 = vpack.c.b16 %v155, %v154
    %v179 = vpack.c.b16 %v157, %v156
    %v180 = vpack.c.b16 %v159, %v158
    %v181 = vpack.c.b16 %v161, %v160
    %v182 = vpack.c.b16 %v163, %v162
    %v183 = vpack.c.b16 %v165, %v164
    %v184 = vpack.c.b16 %v167, %v166
    %v185 = vpack.c.b16 %v169, %v168
    %202 = vmatpush.bf16.msra.mxu0 %v177
    %203 = vmatpush.bf16.msra.mxu0 %v176
    %204 = vmatpush.bf16.msra.mxu0 %v175
    %205 = vmatpush.bf16.msra.mxu0 %v174
    %206 = vmatpush.bf16.msra.mxu0 %v173
    %207 = vmatpush.bf16.msra.mxu0 %v172
    %208 = vmatpush.bf16.msra.mxu0 %v171
    %209 = vmatpush.bf16.msra.mxu0 %v170
    %210 = vmatmul.bf16.gmra.mxu0 %v98
    %v211 = vpop.f32.mrf.mxu0
    %v212 = vadd.f32 0.0, %v211
    %v213 = vpop.f32.mrf.mxu0
    %v214 = vadd.f32 0.0, %v213
    %215 = vmatmul.bf16.gmra.mxu0 %v100
    %v216 = vpop.f32.mrf.mxu0
    %v217 = vadd.f32 0.0, %v216
    %v218 = vpop.f32.mrf.mxu0
    %v219 = vadd.f32 0.0, %v218
    %220 = vdwg.mxu0
    %221 = vmatpush.bf16.msra.mxu0 %v185
    %222 = vmatpush.bf16.msra.mxu0 %v184
    %223 = vmatpush.bf16.msra.mxu0 %v183
    %224 = vmatpush.bf16.msra.mxu0 %v182
    %225 = vmatpush.bf16.msra.mxu0 %v181
    %226 = vmatpush.bf16.msra.mxu0 %v180
    %227 = vmatpush.bf16.msra.mxu0 %v179
    %228 = vmatpush.bf16.msra.mxu0 %v178
    %229 = vmatmul.bf16.gmra.mxu0 %v99
    %v230 = vpop.f32.mrf.mxu0
    %v231 = vadd.f32 %v212, %v230
    %v232 = vpop.f32.mrf.mxu0
    %v233 = vadd.f32 %v214, %v232
    %234 = vmatmul.bf16.gmra.mxu0 %v101
    %v235 = vpop.f32.mrf.mxu0
    %v236 = vadd.f32 %v217, %v235
    %v237 = vpop.f32.mrf.mxu0
    %v238 = vadd.f32 %v219, %v237
    %239 = vdwg.mxu0
    %v240 = vadd.f32 %v231, %v233
    %v241 = vadd.f32 %v240, %v236
    %v242 = vadd.f32 %v241, %v238
    %v243 = vrot.slane %v242, 4
    %v244 = vadd.f32 %v242, %v243
    %v245 = vrot.slane %v244, 2
    %v246 = vadd.f32 %v244, %v245
    %v247 = vrot.slane %v246, 1
    %v248 = vadd.f32 %v246, %v247
    %v249 = vmul.f32 %v231, %v231
    %v250 = vmul.f32 %v233, %v233
    %v251 = vmul.f32 %v236, %v236
    %v252 = vmul.f32 %v238, %v238
    %v253 = vadd.f32 %v249, %v250
    %v254 = vadd.f32 %v253, %v251
    %v255 = vadd.f32 %v254, %v252
    %v256 = vrot.slane %v255, 4
    %v257 = vadd.f32 %v255, %v256
    %v258 = vrot.slane %v257, 2
    %v259 = vadd.f32 %v257, %v258
    %v260 = vrot.slane %v259, 1
    %v261 = vadd.f32 %v259, %v260
    %vm262 = vcmask 1040384
    %v263 = vsel %vm262, %v248, %v261
    %264 = vrot.lane.b32.xlu0 %v263, 8
    %v265 = vpop.permute.xlu0 %264
    %v266 = vadd.f32 %v263, %v265
    %267 = vrot.lane.b32.xlu0 %v266, 16
    %v268 = vpop.permute.xlu0 %267
    %v269 = vadd.f32 %v266, %v268
    %270 = vrot.lane.b32.xlu0 %v269, 32
    %v271 = vpop.permute.xlu0 %270
    %v272 = vadd.f32 %v269, %v271
    %273 = vrot.lane.b32.xlu0 %v272, 64
    %v274 = vpop.permute.xlu0 %273
    %v275 = vadd.f32 %v272, %v274
    %v276 = vmul.f32 %v275, 0.001953125
    %v277 = vmul.f32 %v276, %v276
    %v279 = vrot.slane %v277, 7
    %v281 = vsub.f32 %v276, %v279
    %v282 = vld [vmem:[%s2] sm:$0x1]
    %v283 = vadd.f32 %v281, 1e-05
    %v284 = vrsqrt.pop %v283
    %v285 = vmul.f32 %v284, %v283
    %v286 = vmul.f32 %v285, %v284
    %v287 = vmul.f32 0.5, %v286
    %v288 = vsub.f32 1.5, %v287
    %v289 = vmul.f32 %v284, %v288
    %vm290 = vweird.f32 %v283
    %vm291 = vweird.f32 %v284
    %vm292 = vmor %vm290, %vm291
    %v293 = vsel %vm292, %v284, %v289
    %295 = vst [vmem:[#allocation1] sm:$0xff] %v293
    %s296 = scalar_lea.vmem [#allocation1], 1
    %v297 = vld [vmem:[%s296] ss:$9 sm:$0xff]
    %v299 = vmul.f32 %v282, %v297
    %v300 = vld [vmem:[%s3] sm:$0x1]
    %v301 = vmul.f32 %v276, %v299
    %v302 = vsub.f32 %v300, %v301
    %v304 = vperm.slane %v299, 0
    %v306 = vmul.f32 %v231, %v304
    %v307 = vmul.f32 %v233, %v304
    %v308 = vmul.f32 %v236, %v304
    %v309 = vmul.f32 %v238, %v304
    %v311 = vperm.slane %v302, 0
    %v313 = vadd.f32 %v306, %v311
    %v314 = vadd.f32 %v307, %v311
    %v315 = vadd.f32 %v308, %v311
    %v316 = vadd.f32 %v309, %v311
    %v317 = vmul.f32 %v313, 0.1
    %v318 = vmul.f32 %v314, 0.1
    %v319 = vmul.f32 %v315, 0.1
    %v320 = vmul.f32 %v316, 0.1
    %v321 = vmax.f32 %v313, %v317
    %v322 = vmax.f32 %v314, %v318
    %v323 = vmax.f32 %v315, %v319
    %v324 = vmax.f32 %v316, %v320
    %325 = vst [vmem:[#allocation7] sm:$0xff] %v321
    %326 = vst [vmem:[#allocation7 + $0x8] sm:$0xff] %v322
    %327 = vst [vmem:[#allocation7 + $0x10] sm:$0xff] %v323
    %328 = vst [vmem:[#allocation7 + $0x18] sm:$0xff] %v324
    // Predicated region
    $region26: #{tpu_custom_call.1} parent=1 // pred_check
      _
    $region27: #{tpu_custom_call.1} parent=1 // pred_check_branch
      %330 = sbr.rel (0) target = $region29
    $region28: #{tpu_custom_call.1} parent=1 // pred_region
      %332 = vsyncadd [#allocation4], 0
      %s333 = sshll.u32 [#allocation7], 4
      %s334 = int_to_ptr.vmem [resolvable:$true] %s333
      %s335 = sshll.u32 %s4, 4
      %s336 = int_to_ptr.hbm [resolvable:$true] %s335
      %341 = dma.vmem_to_hbm [thread:$0]  %s334, 512, %s336, [#allocation4], 128, 128, 8
    $region29: #{tpu_custom_call.1} parent=1 // pred_fallthru
      _
    // Predicated region
    $region30: #{tpu_custom_call.1} parent=1 // pred_check
      _
    $region31: #{tpu_custom_call.1} parent=1 // pred_check_branch
      %343 = sbr.rel (0) target = $region33
    $region32: #{tpu_custom_call.1} parent=1 // pred_region
      %345 = dma.done [#allocation4], 512
    $region33: #{tpu_custom_call.1} parent=1 // pred_fallthru
      _
    %346 = vsyncpa [#allocation3], 1
    %347 = vsyncpa [#allocation6], 1
    %348 = vsyncpa [#allocation4], 1

</llo_original>
